<compile_context>
chip_gen: v6e
topology: v6e:2x2x1
jax: 0.10.0
libtpu: 0.0.40
codegen_flags: <defaults>
</compile_context>

<pallas_src>
import jax
import jax.numpy as jnp
from jax import lax
from jax.experimental import pallas as pl
from jax.experimental.pallas import tpu as pltpu

C_MID = 8                   # conv1 out channels
C_OUT = 16                  # conv2 out channels
K = 3                       # conv2 kernel size
_TAPS = K * K               # 9
_NP4 = _TAPS * C_MID        # 72  (relu(2*conv1) rows: tap-major, then channel)
_KBIG = _NP4 + _TAPS        # 81  (matmul contraction length)
_P_ROWS = 2 * C_OUT + C_MID  # 40 (packed params rows)
_P_COLS = 128               # packed params lanes (one lane tile)


def _fused_kernel(px_ref, params_ref, o_ref):
    """Fully fused forward pass (one MXU contraction), channel-major.

    px_ref     : (9, S)    im2col rows of the zero-padded input, S = H*W (lanes)
    params_ref : (40, 128) packed parameters:
                   [0:32, 0:81] = W_big  (rows 0..15: [2*W2_flat | WB],
                                          rows 16..31: [0        | WB])
                   [0:32, 81]   = bias   (rows 0..15: 3*b2, rows 16..31: b2)
                   [32:40, 0]   = 2*w1   (conv1 1x1 weight per mid channel)
                   [32:40, 1]   = 2*b1   (conv1 bias)
    o_ref      : (16, S)   output, channel-major (== NCHW after a free reshape)
    """
    px = px_ref[...]                                   # (9, S)
    s = px.shape[1]
    w1s = params_ref[32:40, 0:1]                       # (8, 1) = 2*w1
    b1s = params_ref[32:40, 1:2]                       # (8, 1) = 2*b1

    # v4 = relu(2*conv1(x)) at every 3x3 tap, in one vectorized pass:
    #   p4[k, c, :] = relu(2*w1[c]*x_pad_tap_k + 2*b1[c])
    p4 = jnp.maximum(px[:, None, :] * w1s[None, :, :] + b1s[None, :, :], 0.0)
    xbig = jnp.concatenate([p4.reshape(_NP4, s), px], axis=0)       # (81, S)

    # One MXU pass: rows 0..15 -> 2*conv2(v4) + conv2(x_b) (sans bias),
    #               rows 16..31 ->             conv2(x_b) (sans bias).
    res = jnp.dot(params_ref[0:2 * C_OUT, 0:_KBIG], xbig,
                  preferred_element_type=jnp.float32,
                  precision=jax.lax.Precision.HIGHEST)              # (32, S)
    res = res + params_ref[0:2 * C_OUT, _KBIG:_KBIG + 1]            # + bias col

    o_ref[...] = (jnp.maximum(res[0:C_OUT, :], 0.0)
                  + jnp.maximum(res[C_OUT:2 * C_OUT, :], 0.0))


def model_forward(x_nchw, w1, b1, w2, b2):
    n, cin, h, w = x_nchw.shape
    assert n == 1 and cin == 1
    s = h * w

    # ---- tiny XLA-side glue: zero-pad + 9-row im2col of the 1-channel input ----
    # TODO(synk): torch's self.conv2(x1) is invalid as written (x1 has 1 channel,
    # conv2 expects 8, and its pad=0 output could not broadcast-add anyway); we
    # implement the documented repair: B = conv2(x broadcast to 8 channels, pad=1).
    x_pad = jnp.pad(x_nchw[0, 0], ((1, 1), (1, 1)))                 # (H+2, W+2)
    px = jnp.stack([x_pad[ky:ky + h, kx:kx + w].reshape(s)
                    for ky in range(K) for kx in range(K)], axis=0)  # (9, S)

    # ---- fold the constant 2s and both biases into the packed weights ----
    w2f = jnp.transpose(w2, (0, 2, 3, 1)).reshape(C_OUT, _NP4)      # col = k*8+c
    wb = jnp.sum(w2, axis=1).reshape(C_OUT, _TAPS)                  # col = k
    wbig = jnp.concatenate(
        [jnp.concatenate([2.0 * w2f, wb], axis=1),                  # 2*A_raw+B_raw
         jnp.concatenate([jnp.zeros_like(w2f), wb], axis=1)],       # B_raw
        axis=0)                                                     # (32, 81)
    bias = jnp.concatenate([3.0 * b2, b2], axis=0)                  # (32,)

    params = jnp.zeros((_P_ROWS, _P_COLS), jnp.float32)
    params = params.at[0:2 * C_OUT, 0:_KBIG].set(wbig)
    params = params.at[0:2 * C_OUT, _KBIG].set(bias)
    params = params.at[2 * C_OUT:_P_ROWS, 0].set(2.0 * w1.reshape(C_MID))
    params = params.at[2 * C_OUT:_P_ROWS, 1].set(2.0 * b1.reshape(C_MID))

    # Single whole-block invocation (no grid, no pipelining machinery).
    out_cm = pl.pallas_call(
        _fused_kernel,
        out_shape=jax.ShapeDtypeStruct((C_OUT, s), jnp.float32),
        in_specs=[pl.BlockSpec(memory_space=pltpu.MemorySpace.VMEM),
                  pl.BlockSpec(memory_space=pltpu.MemorySpace.VMEM)],
        out_specs=pl.BlockSpec(memory_space=pltpu.MemorySpace.VMEM),
    )(px, params)

    # Channel-major (16, H*W) -> NCHW (1, 16, H, W): free reshape, no transpose.
    return out_cm.reshape(1, C_OUT, h, w)


def reference(x_nchw, w1, b1, w2, b2):
    # Pure-JAX reference of the same (repaired) graph.
    hp = jax.lax.Precision.HIGHEST
    dn1 = lax.conv_dimension_numbers(x_nchw.shape, w1.shape, ("NCHW", "OIHW", "NCHW"))
    v1 = lax.conv_general_dilated(x_nchw, w1, (1, 1), ((1, 1), (1, 1)),
                                  dimension_numbers=dn1,
                                  precision=hp) + b1[None, :, None, None]
    v4 = jnp.maximum(2.0 * v1, 0.0)
    dn2 = lax.conv_dimension_numbers(v4.shape, w2.shape, ("NCHW", "OIHW", "NCHW"))
    a = lax.conv_general_dilated(v4, w2, (1, 1), ((0, 0), (0, 0)),
                                 dimension_numbers=dn2,
                                 precision=hp) + b2[None, :, None, None]
    xb = jnp.broadcast_to(x_nchw, (1, C_MID, x_nchw.shape[2], x_nchw.shape[3]))
    b = lax.conv_general_dilated(xb, w2, (1, 1), ((1, 1), (1, 1)),
                                 dimension_numbers=dn2,
                                 precision=hp) + b2[None, :, None, None]
    return jnp.maximum(2.0 * a + b, 0.0) + jnp.maximum(b, 0.0)


if __name__ == "__main__":
    key = jax.random.PRNGKey(0)
    k1, k2, k3, k4, k5 = jax.random.split(key, 5)
    H = W = 16
    x1 = jax.random.normal(k1, (1, 1, H, W), jnp.float32)
    w1 = jax.random.normal(k2, (C_MID, 1, 1, 1), jnp.float32) * 0.5
    b1 = jax.random.normal(k3, (C_MID,), jnp.float32) * 0.1
    w2 = jax.random.normal(k4, (C_OUT, C_MID, K, K), jnp.float32) * 0.1
    b2 = jax.random.normal(k5, (C_OUT,), jnp.float32) * 0.1

    out = jax.jit(model_forward)(x1, w1, b1, w2, b2)
    out = jax.block_until_ready(out)

    ref = reference(x1, w1, b1, w2, b2)
    assert out.shape == (1, C_OUT, H, W), out.shape
    err = float(jnp.max(jnp.abs(out - ref)))
    assert jnp.allclose(out, ref, atol=1e-3, rtol=1e-3), err
    print("KERNEL_OK")
</pallas_src>

<mosaic_0001>
module attributes {stable_mosaic.version = 11 : i64} {
  func.func @_fused_kernel(%arg0: memref<9x256xf32, #tpu.memory_space<vmem>>, %arg1: memref<40x128xf32, #tpu.memory_space<vmem>>, %arg2: memref<16x256xf32, #tpu.memory_space<vmem>>) attributes {dimension_semantics = [], scalar_prefetch = 0 : i64, scratch_operands = 0 : i64, tpu.core_type = #tpu.core_type<tc>} {
    %c0 = arith.constant 0 : index
    %c0_0 = arith.constant 0 : index
    %0 = vector.load %arg0[%c0, %c0_0] : memref<9x256xf32, #tpu.memory_space<vmem>>, vector<9x256xf32>
    %c32 = arith.constant 32 : index
    %c0_1 = arith.constant 0 : index
    %1 = vector.load %arg1[%c32, %c0_1] : memref<40x128xf32, #tpu.memory_space<vmem>>, vector<8x1xf32>
    %c32_2 = arith.constant 32 : index
    %c1 = arith.constant 1 : index
    %2 = vector.load %arg1[%c32_2, %c1] : memref<40x128xf32, #tpu.memory_space<vmem>>, vector<8x1xf32>
    %3 = vector.shape_cast %0 : vector<9x256xf32> to vector<9x1x256xf32>
    %4 = vector.shape_cast %1 : vector<8x1xf32> to vector<1x8x1xf32>
    %5 = vector.broadcast %3 : vector<9x1x256xf32> to vector<9x8x256xf32>
    %6 = vector.broadcast %4 : vector<1x8x1xf32> to vector<9x8x256xf32>
    %7 = arith.mulf %5, %6 : vector<9x8x256xf32>
    %8 = vector.shape_cast %2 : vector<8x1xf32> to vector<1x8x1xf32>
    %9 = vector.broadcast %8 : vector<1x8x1xf32> to vector<9x8x256xf32>
    %10 = arith.addf %7, %9 : vector<9x8x256xf32>
    %cst = arith.constant 0.000000e+00 : f32
    %11 = vector.broadcast %cst : f32 to vector<9x8x256xf32>
    %12 = arith.maximumf %10, %11 : vector<9x8x256xf32>
    %13 = vector.shape_cast %12 : vector<9x8x256xf32> to vector<72x256xf32>
    %14 = tpu.concatenate %13, %0 in 0 : vector<72x256xf32>, vector<9x256xf32> -> vector<81x256xf32>
    %c0_3 = arith.constant 0 : index
    %c0_4 = arith.constant 0 : index
    %15 = vector.load %arg1[%c0_3, %c0_4] : memref<40x128xf32, #tpu.memory_space<vmem>>, vector<32x81xf32>
    %cst_5 = arith.constant dense<0.000000e+00> : vector<32x256xf32>
    %16 = tpu.matmul %15, %14, %cst_5 {dimension_numbers = #tpu.dot_dimension_numbers<[1], [0], [0], [1], [0, 0, 1, 1], [], []>, precision = #tpu.contract_precision<fp32>} : vector<32x81xf32>, vector<81x256xf32>, vector<32x256xf32> -> vector<32x256xf32>
    %c0_6 = arith.constant 0 : index
    %c81 = arith.constant 81 : index
    %17 = vector.load %arg1[%c0_6, %c81] : memref<40x128xf32, #tpu.memory_space<vmem>>, vector<32x1xf32>
    %18 = vector.broadcast %17 : vector<32x1xf32> to vector<32x256xf32>
    %19 = arith.addf %16, %18 : vector<32x256xf32>
    %20 = vector.extract_strided_slice %19 {offsets = [0, 0], sizes = [16, 256], strides = [1, 1]} : vector<32x256xf32> to vector<16x256xf32>
    %cst_7 = arith.constant 0.000000e+00 : f32
    %21 = vector.broadcast %cst_7 : f32 to vector<16x256xf32>
    %22 = arith.maximumf %20, %21 : vector<16x256xf32>
    %23 = vector.extract_strided_slice %19 {offsets = [16, 0], sizes = [16, 256], strides = [1, 1]} : vector<32x256xf32> to vector<16x256xf32>
    %cst_8 = arith.constant 0.000000e+00 : f32
    %24 = vector.broadcast %cst_8 : f32 to vector<16x256xf32>
    %25 = arith.maximumf %23, %24 : vector<16x256xf32>
    %26 = arith.addf %22, %25 : vector<16x256xf32>
    %c0_9 = arith.constant 0 : index
    %c0_10 = arith.constant 0 : index
    %27 = vector.load %arg2[%c0_9, %c0_10] : memref<16x256xf32, #tpu.memory_space<vmem>>, vector<16x256xf32>
    tpu.vector_store %arg2[%c0_9, %c0_10], %26 {strides = array<i32>} : memref<16x256xf32, #tpu.memory_space<vmem>>, vector<16x256xf32>,
    return
  }
}

</mosaic_0001>

<llo_original>
// kernel: model_forward.1
$region0: #{model_forward.1}
  #allocation0 [shape = 'u32[]', space=smem, size = 0x4, offset = 0x4, fixed_abs, tag = 'smem constant byte address 0x4 - core index']
  #allocation1 [shape = 'u32[144,128]{1,0:T(1,128)}', space=vmem, size = 0x12000, scoped, tag = 'internal scratch']
  %s0 = inlined_call_operand.vmem [shape: f32[9,256], index: 0, kind: input, shape index: {}]
  %s1 = inlined_call_operand.vmem [shape: f32[40,128], index: 1, kind: input, shape index: {}]
  %s2 = inlined_call_operand.vmem [shape: f32[16,256], index: 2, kind: output, shape index: {}]
  %s3 = sld [smem:[#allocation0]]
  $region18: #{model_forward.1} parent=0
    _
  %s5 = ssub.s32 1, %s3
  %s6 = scalar_select 0, %s5, %s3
  // Predicated region
  $region2: #{model_forward.1} parent=0 // pred_check
    _
  $region3: #{model_forward.1} parent=0 // pred_check_branch
    %8 = sbr.rel (0) target = $region5
  $region4: #{model_forward.1} parent=0 // pred_region
    _
  $region5: #{model_forward.1} parent=0 // pred_fallthru
    _
  // Predicated region
  $region6: #{model_forward.1} parent=0 // pred_check
    _
  $region7: #{model_forward.1} parent=0 // pred_check_branch
    %10 = sbr.rel (0) target = $region9
  $region8: #{model_forward.1} parent=0 // pred_region
    _
  $region9: #{model_forward.1} parent=0 // pred_fallthru
    _
  %v11 = vld [vmem:[%s0] sm:$0xff]
  %v12 = vld [vmem:[%s0 + $0x8] sm:$0xff]
  %v13 = vld [vmem:[%s0 + $0x10] sm:$0x1]
  %v14 = vld [vmem:[%s0 + $0x18] sm:$0x1]
  %v15 = vld [vmem:[%s1 + $0x20] sm:$0xff]
  %v20 = vcombine.low %v11, %v12
  %v21 = vcombine.high %v11, %v12
  %v23 = vunpack.c.l.s4 1966171168
  %v24 = vunpack.c.0.s8 %v23
  %v25 = vlaneseq
  %v26 = vshrl.u32 %v25, 7
  %v27 = vsub.s32 %v24, %v26
  %v28 = vrot.slane %v20, %v27
  %v30 = vunpack.c.l.s4 1966171168
  %v31 = vunpack.c.0.s8 %v30
  %v32 = vlaneseq
  %v33 = vshrl.u32 %v32, 7
  %v34 = vsub.s32 %v31, %v33
  %v35 = vrot.slane %v21, %v34
  %v36 = vcombine.high %v28, %v28
  %v37 = vcombine.high %v35, %v35
  %v39 = vunpack.c.l.s4 1966171168
  %v40 = vunpack.c.0.s8 %v39
  %v41 = vlaneseq
  %v42 = vshrl.u32 %v41, 7
  %v43 = vsub.s32 %v40, %v42
  %v44 = vrot.slane %v28, %v43
  %v46 = vunpack.c.l.s4 1966171168
  %v47 = vunpack.c.0.s8 %v46
  %v48 = vlaneseq
  %v49 = vshrl.u32 %v48, 7
  %v50 = vsub.s32 %v47, %v49
  %v51 = vrot.slane %v35, %v50
  %v53 = vunpack.c.l.s4 1966171168
  %v54 = vunpack.c.0.s8 %v53
  %v55 = vlaneseq
  %v56 = vshrl.u32 %v55, 7
  %v57 = vsub.s32 %v54, %v56
  %v58 = vrot.slane %v36, %v57
  %v60 = vunpack.c.l.s4 1966171168
  %v61 = vunpack.c.0.s8 %v60
  %v62 = vlaneseq
  %v63 = vshrl.u32 %v62, 7
  %v64 = vsub.s32 %v61, %v63
  %v65 = vrot.slane %v37, %v64
  %v66 = vcombine.high %v44, %v44
  %v67 = vcombine.high %v51, %v51
  %v68 = vcombine.high %v58, %v58
  %v69 = vcombine.high %v65, %v65
  %v70 = vcombine.low %v13, %v14
  %v72 = vunpack.c.l.s4 1966171168
  %v73 = vunpack.c.0.s8 %v72
  %v74 = vlaneseq
  %v75 = vshrl.u32 %v74, 7
  %v76 = vsub.s32 %v73, %v75
  %v77 = vrot.slane %v70, %v76
  %v79 = vunpack.c.l.s4 1966171168
  %v80 = vunpack.c.0.s8 %v79
  %v81 = vlaneseq
  %v82 = vshrl.u32 %v81, 7
  %v83 = vsub.s32 %v80, %v82
  %v84 = vrot.slane %v77, %v83
  %v85 = vlaneseq
  %v86 = vshrl.u32 %v85, 7
  %v87 = vsub.s32 0, %v86
  %v88 = vrot.slane %v44, %v87
  %v89 = vlaneseq
  %v90 = vshrl.u32 %v89, 7
  %v91 = vsub.s32 1, %v90
  %v92 = vrot.slane %v44, %v91
  %v93 = vlaneseq
  %v94 = vshrl.u32 %v93, 7
  %v95 = vsub.s32 0, %v94
  %v96 = vrot.slane %v58, %v95
  %v97 = vlaneseq
  %v98 = vshrl.u32 %v97, 7
  %v99 = vsub.s32 1, %v98
  %v100 = vrot.slane %v58, %v99
  %v101 = vlaneseq
  %v102 = vshrl.u32 %v101, 7
  %v103 = vsub.s32 0, %v102
  %v104 = vrot.slane %v66, %v103
  %v105 = vlaneseq
  %v106 = vshrl.u32 %v105, 7
  %v107 = vsub.s32 1, %v106
  %v108 = vrot.slane %v66, %v107
  %v109 = vlaneseq
  %v110 = vshrl.u32 %v109, 7
  %v111 = vsub.s32 0, %v110
  %v112 = vrot.slane %v68, %v111
  %v113 = vlaneseq
  %v114 = vshrl.u32 %v113, 7
  %v115 = vsub.s32 1, %v114
  %v116 = vrot.slane %v68, %v115
  %v117 = vlaneseq
  %v118 = vshrl.u32 %v117, 7
  %v119 = vsub.s32 0, %v118
  %v120 = vrot.slane %v51, %v119
  %v121 = vlaneseq
  %v122 = vshrl.u32 %v121, 7
  %v123 = vsub.s32 1, %v122
  %v124 = vrot.slane %v51, %v123
  %v125 = vlaneseq
  %v126 = vshrl.u32 %v125, 7
  %v127 = vsub.s32 0, %v126
  %v128 = vrot.slane %v65, %v127
  %v129 = vlaneseq
  %v130 = vshrl.u32 %v129, 7
  %v131 = vsub.s32 1, %v130
  %v132 = vrot.slane %v65, %v131
  %v133 = vlaneseq
  %v134 = vshrl.u32 %v133, 7
  %v135 = vsub.s32 0, %v134
  %v136 = vrot.slane %v67, %v135
  %v137 = vlaneseq
  %v138 = vshrl.u32 %v137, 7
  %v139 = vsub.s32 1, %v138
  %v140 = vrot.slane %v67, %v139
  %v141 = vlaneseq
  %v142 = vshrl.u32 %v141, 7
  %v143 = vsub.s32 0, %v142
  %v144 = vrot.slane %v69, %v143
  %v145 = vlaneseq
  %v146 = vshrl.u32 %v145, 7
  %v147 = vsub.s32 1, %v146
  %v148 = vrot.slane %v69, %v147
  %v149 = vlaneseq
  %v150 = vshrl.u32 %v149, 7
  %v151 = vsub.s32 0, %v150
  %v152 = vrot.slane %v84, %v151
  %v153 = vlaneseq
  %v154 = vshrl.u32 %v153, 7
  %v155 = vsub.s32 1, %v154
  %v156 = vrot.slane %v84, %v155
  %176 = vset.pattern.permute.xlu0 0
  %177 = vperm.xlu0 %176, %v15
  %v178 = vpop.permute.xlu0 %177
  %v180 = vmul.f32 %v88, %v178
  %v181 = vmul.f32 %v92, %v178
  %v182 = vmul.f32 %v96, %v178
  %v183 = vmul.f32 %v100, %v178
  %v184 = vmul.f32 %v104, %v178
  %v185 = vmul.f32 %v108, %v178
  %v186 = vmul.f32 %v112, %v178
  %v187 = vmul.f32 %v116, %v178
  %v188 = vmul.f32 %v120, %v178
  %v189 = vmul.f32 %v124, %v178
  %v190 = vmul.f32 %v128, %v178
  %v191 = vmul.f32 %v132, %v178
  %v192 = vmul.f32 %v136, %v178
  %v193 = vmul.f32 %v140, %v178
  %v194 = vmul.f32 %v144, %v178
  %v195 = vmul.f32 %v148, %v178
  %v196 = vmul.f32 %v152, %v178
  %v197 = vmul.f32 %v156, %v178
  %198 = vset.pattern.permute.xlu0 1
  %199 = vperm.xlu0 %198, %v15
  %v200 = vpop.permute.xlu0 %199
  %v202 = vadd.f32 %v180, %v200
  %v203 = vadd.f32 %v181, %v200
  %v204 = vadd.f32 %v182, %v200
  %v205 = vadd.f32 %v183, %v200
  %v206 = vadd.f32 %v184, %v200
  %v207 = vadd.f32 %v185, %v200
  %v208 = vadd.f32 %v186, %v200
  %v209 = vadd.f32 %v187, %v200
  %v210 = vadd.f32 %v188, %v200
  %v211 = vadd.f32 %v189, %v200
  %v212 = vadd.f32 %v190, %v200
  %v213 = vadd.f32 %v191, %v200
  %v214 = vadd.f32 %v192, %v200
  %v215 = vadd.f32 %v193, %v200
  %v216 = vadd.f32 %v194, %v200
  %v217 = vadd.f32 %v195, %v200
  %v218 = vadd.f32 %v196, %v200
  %v219 = vadd.f32 %v197, %v200
  %v220 = vmax.f32 %v202, 0.0
  %v221 = vmax.f32 %v203, 0.0
  %v222 = vmax.f32 %v204, 0.0
  %v223 = vmax.f32 %v205, 0.0
  %v224 = vmax.f32 %v206, 0.0
  %v225 = vmax.f32 %v207, 0.0
  %v226 = vmax.f32 %v208, 0.0
  %v227 = vmax.f32 %v209, 0.0
  %v228 = vmax.f32 %v210, 0.0
  %v229 = vmax.f32 %v211, 0.0
  %v230 = vmax.f32 %v212, 0.0
  %v231 = vmax.f32 %v213, 0.0
  %v232 = vmax.f32 %v214, 0.0
  %v233 = vmax.f32 %v215, 0.0
  %v234 = vmax.f32 %v216, 0.0
  %v235 = vmax.f32 %v217, 0.0
  %v236 = vmax.f32 %v218, 0.0
  %v237 = vmax.f32 %v219, 0.0
  %v238 = vld [vmem:[%s1] sm:$0xff]
  %v239 = vld [vmem:[%s1 + $0x8] sm:$0xff]
  %v240 = vld [vmem:[%s1 + $0x10] sm:$0xff]
  %v241 = vld [vmem:[%s1 + $0x18] sm:$0xff]
  %243 = vset.pattern.permute.xlu0 81
  %244 = vperm.xlu0 %243, %v238
  %v245 = vpop.permute.xlu0 %244
  %248 = vset.pattern.permute.xlu0 81
  %249 = vperm.xlu0 %248, %v239
  %v250 = vpop.permute.xlu0 %249
  %253 = vset.pattern.permute.xlu0 81
  %254 = vperm.xlu0 %253, %v240
  %v255 = vpop.permute.xlu0 %254
  %258 = vset.pattern.permute.xlu0 81
  %259 = vperm.xlu0 %258, %v241
  %v260 = vpop.permute.xlu0 %259
  %vm262 = vcmask 662528
  %v263 = vsel %vm262, %v238, 0
  %v265 = vsel %vm262, %v239, 0
  %v267 = vsel %vm262, %v240, 0
  %v269 = vsel %vm262, %v241, 0
  %vm271 = vcmask 1040384
  %v272 = vsel %vm271, %v13, 0
  %v274 = vsel %vm271, %v14, 0
  %276 = vmatprep.subr.mxu0 0.0
  %277 = vmatpush1.msra.mxu0 0.0
  %278 = vmatprep.subr.mxu0 0.0
  %279 = vmatpush1.msra.mxu0 0.0
  %280 = vmatprep.subr.mxu0 0.0
  %281 = vmatpush1.msra.mxu0 0.0
  %282 = vmatprep.subr.mxu0 0.0
  %283 = vmatpush1.msra.mxu0 0.0
  %284 = vmatprep.subr.mxu0 0.0
  %285 = vmatpush1.msra.mxu0 0.0
  %v286 = vand.u32 %v274, 4294901760
  %287 = vmatprep.subr.mxu0 %v286
  %v288 = vand.u32 %v272, 4294901760
  %289 = vmatpush1.msra.mxu0 %v288
  %v290 = vand.u32 %v12, 4294901760
  %291 = vmatprep.subr.mxu0 %v290
  %v292 = vand.u32 %v11, 4294901760
  %293 = vmatpush1.msra.mxu0 %v292
  %v294 = vand.u32 %v237, 4294901760
  %295 = vmatprep.subr.mxu0 %v294
  %v296 = vand.u32 %v236, 4294901760
  %297 = vmatpush1.msra.mxu0 %v296
  %v298 = vand.u32 %v235, 4294901760
  %299 = vmatprep.subr.mxu0 %v298
  %v300 = vand.u32 %v234, 4294901760
  %301 = vmatpush1.msra.mxu0 %v300
  %v302 = vand.u32 %v233, 4294901760
  %303 = vmatprep.subr.mxu0 %v302
  %v304 = vand.u32 %v232, 4294901760
  %305 = vmatpush1.msra.mxu0 %v304
  %v306 = vand.u32 %v231, 4294901760
  %307 = vmatprep.subr.mxu0 %v306
  %v308 = vand.u32 %v230, 4294901760
  %309 = vmatpush1.msra.mxu0 %v308
  %v310 = vand.u32 %v229, 4294901760
  %311 = vmatprep.subr.mxu0 %v310
  %v312 = vand.u32 %v228, 4294901760
  %313 = vmatpush1.msra.mxu0 %v312
  %v314 = vand.u32 %v227, 4294901760
  %315 = vmatprep.subr.mxu0 %v314
  %v316 = vand.u32 %v226, 4294901760
  %317 = vmatpush1.msra.mxu0 %v316
  %v318 = vand.u32 %v225, 4294901760
  %319 = vmatprep.subr.mxu0 %v318
  %v320 = vand.u32 %v224, 4294901760
  %321 = vmatpush1.msra.mxu0 %v320
  %v322 = vand.u32 %v223, 4294901760
  %323 = vmatprep.subr.mxu0 %v322
  %v324 = vand.u32 %v222, 4294901760
  %325 = vmatpush1.msra.mxu0 %v324
  %v326 = vand.u32 %v221, 4294901760
  %327 = vmatprep.subr.mxu0 %v326
  %v328 = vand.u32 %v220, 4294901760
  %329 = vmatpush1.msra.mxu0 %v328
  %330 = vmatprep.subr.mxu0 0.0
  %331 = vmatpush2.msra.mxu0 0.0
  %332 = vmatprep.subr.mxu0 0.0
  %333 = vmatpush2.msra.mxu0 0.0
  %334 = vmatprep.subr.mxu0 0.0
  %335 = vmatpush2.msra.mxu0 0.0
  %336 = vmatprep.subr.mxu0 0.0
  %337 = vmatpush2.msra.mxu0 0.0
  %338 = vmatprep.subr.mxu0 0.0
  %339 = vmatpush2.msra.mxu0 0.0
  %340 = vmatprep.subr.mxu0 0.0
  %341 = vmatpush2.msra.mxu0 0.0
  %342 = vmatprep.subr.mxu0 0.0
  %343 = vmatpush2.msra.mxu0 0.0
  %344 = vmatprep.subr.mxu0 0.0
  %345 = vmatpush2.msra.mxu0 0.0
  %346 = vmatprep.subr.mxu0 0.0
  %347 = vmatpush2.msra.mxu0 0.0
  %348 = vmatprep.subr.mxu0 0.0
  %349 = vmatpush2.msra.mxu0 0.0
  %350 = vmatprep.subr.mxu0 0.0
  %351 = vmatpush2.msra.mxu0 0.0
  %352 = vmatprep.subr.mxu0 0.0
  %353 = vmatpush2.msra.mxu0 0.0
  %354 = vmatprep.subr.mxu0 0.0
  %355 = vmatpush2.msra.mxu0 0.0
  %356 = vmatprep.subr.mxu0 0.0
  %357 = vmatpush2.msra.mxu0 0.0
  %358 = vmatprep.subr.mxu0 0.0
  %359 = vmatpush2.msra.mxu0 0.0
  %360 = vmatprep.subr.mxu0 0.0
  %361 = vmatpush2.msra.mxu0 0.0
  %362 = vmatprep.mubr.f32.mxu0 0.0
  %v363 = vand.u32 %v263, 4294901760
  %v364 = vsub.f32 %v263, %v363
  %v365 = vand.u32 %v364, 4294901760
  %v366 = vsub.f32 %v364, %v365
  %v367 = vand.u32 %v366, 4294901760
  %368 = vmatmul.mubr.f32.gmra.mxu0 %v367
  %v369 = vpop.f32.mrf.mxu0
  %v370 = vadd.f32 %v245, %v369
  %v371 = vpop.f32.mrf.mxu0
  %v372 = vadd.f32 %v245, %v371
  %373 = vmatprep.mubr.f32.mxu0 0.0
  %v374 = vand.u32 %v265, 4294901760
  %v375 = vsub.f32 %v265, %v374
  %v376 = vand.u32 %v375, 4294901760
  %v377 = vsub.f32 %v375, %v376
  %v378 = vand.u32 %v377, 4294901760
  %379 = vmatmul.mubr.f32.gmra.mxu0 %v378
  %v380 = vpop.f32.mrf.mxu0
  %v381 = vadd.f32 %v250, %v380
  %v382 = vpop.f32.mrf.mxu0
  %v383 = vadd.f32 %v250, %v382
  %384 = vmatprep.mubr.f32.mxu0 0.0
  %v385 = vand.u32 %v267, 4294901760
  %v386 = vsub.f32 %v267, %v385
  %v387 = vand.u32 %v386, 4294901760
  %v388 = vsub.f32 %v386, %v387
  %v389 = vand.u32 %v388, 4294901760
  %390 = vmatmul.mubr.f32.gmra.mxu0 %v389
  %v391 = vpop.f32.mrf.mxu0
  %v392 = vadd.f32 %v255, %v391
  %v393 = vpop.f32.mrf.mxu0
  %v394 = vadd.f32 %v255, %v393
  %395 = vmatprep.mubr.f32.mxu0 0.0
  %v396 = vand.u32 %v269, 4294901760
  %v397 = vsub.f32 %v269, %v396
  %v398 = vand.u32 %v397, 4294901760
  %v399 = vsub.f32 %v397, %v398
  %v400 = vand.u32 %v399, 4294901760
  %401 = vmatmul.mubr.f32.gmra.mxu0 %v400
  %v402 = vpop.f32.mrf.mxu0
  %v403 = vadd.f32 %v260, %v402
  %v404 = vpop.f32.mrf.mxu0
  %v405 = vadd.f32 %v260, %v404
  %406 = vdwg.mxu0
  %407 = vmatprep.subr.mxu0 0.0
  %408 = vmatpush1.msra.mxu0 0.0
  %409 = vmatprep.subr.mxu0 0.0
  %410 = vmatpush1.msra.mxu0 0.0
  %411 = vmatprep.subr.mxu0 0.0
  %412 = vmatpush1.msra.mxu0 0.0
  %413 = vmatprep.subr.mxu0 0.0
  %414 = vmatpush1.msra.mxu0 0.0
  %415 = vmatprep.subr.mxu0 0.0
  %416 = vmatpush1.msra.mxu0 0.0
  %v417 = vand.u32 %v274, 4294901760
  %v418 = vsub.f32 %v274, %v417
  %v419 = vand.u32 %v418, 4294901760
  %v420 = vsub.f32 %v418, %v419
  %v421 = vand.u32 %v420, 4294901760
  %422 = vmatprep.subr.mxu0 %v421
  %v423 = vand.u32 %v272, 4294901760
  %v424 = vsub.f32 %v272, %v423
  %v425 = vand.u32 %v424, 4294901760
  %v426 = vsub.f32 %v424, %v425
  %v427 = vand.u32 %v426, 4294901760
  %428 = vmatpush1.msra.mxu0 %v427
  %v429 = vand.u32 %v12, 4294901760
  %v430 = vsub.f32 %v12, %v429
  %v431 = vand.u32 %v430, 4294901760
  %v432 = vsub.f32 %v430, %v431
  %v433 = vand.u32 %v432, 4294901760
  %434 = vmatprep.subr.mxu0 %v433
  %v435 = vand.u32 %v11, 4294901760
  %v436 = vsub.f32 %v11, %v435
  %v437 = vand.u32 %v436, 4294901760
  %v438 = vsub.f32 %v436, %v437
  %v439 = vand.u32 %v438, 4294901760
  %440 = vmatpush1.msra.mxu0 %v439
  %v441 = vand.u32 %v237, 4294901760
  %v442 = vsub.f32 %v237, %v441
  %v443 = vand.u32 %v442, 4294901760
  %v444 = vsub.f32 %v442, %v443
  %v445 = vand.u32 %v444, 4294901760
  %446 = vmatprep.subr.mxu0 %v445
  %v447 = vand.u32 %v236, 4294901760
  %v448 = vsub.f32 %v236, %v447
  %v449 = vand.u32 %v448, 4294901760
  %v450 = vsub.f32 %v448, %v449
  %v451 = vand.u32 %v450, 4294901760
  %452 = vmatpush1.msra.mxu0 %v451
  %v453 = vand.u32 %v235, 4294901760
  %v454 = vsub.f32 %v235, %v453
  %v455 = vand.u32 %v454, 4294901760
  %v456 = vsub.f32 %v454, %v455
  %v457 = vand.u32 %v456, 4294901760
  %458 = vmatprep.subr.mxu0 %v457
  %v459 = vand.u32 %v234, 4294901760
  %v460 = vsub.f32 %v234, %v459
  %v461 = vand.u32 %v460, 4294901760
  %v462 = vsub.f32 %v460, %v461
  %v463 = vand.u32 %v462, 4294901760
  %464 = vmatpush1.msra.mxu0 %v463
  %v465 = vand.u32 %v233, 4294901760
  %v466 = vsub.f32 %v233, %v465
  %v467 = vand.u32 %v466, 4294901760
  %v468 = vsub.f32 %v466, %v467
  %v469 = vand.u32 %v468, 4294901760
  %470 = vmatprep.subr.mxu0 %v469
  %v471 = vand.u32 %v232, 4294901760
  %v472 = vsub.f32 %v232, %v471
  %v473 = vand.u32 %v472, 4294901760
  %v474 = vsub.f32 %v472, %v473
  %v475 = vand.u32 %v474, 4294901760
  %476 = vmatpush1.msra.mxu0 %v475
  %v477 = vand.u32 %v231, 4294901760
  %v478 = vsub.f32 %v231, %v477
  %v479 = vand.u32 %v478, 4294901760
  %v480 = vsub.f32 %v478, %v479
  %v481 = vand.u32 %v480, 4294901760
  %482 = vmatprep.subr.mxu0 %v481
  %v483 = vand.u32 %v230, 4294901760
  %v484 = vsub.f32 %v230, %v483
  %v485 = vand.u32 %v484, 4294901760
  %v486 = vsub.f32 %v484, %v485
  %v487 = vand.u32 %v486, 4294901760
  %488 = vmatpush1.msra.mxu0 %v487
  %v489 = vand.u32 %v229, 4294901760
  %v490 = vsub.f32 %v229, %v489
  %v491 = vand.u32 %v490, 4294901760
  %v492 = vsub.f32 %v490, %v491
  %v493 = vand.u32 %v492, 4294901760
  %494 = vmatprep.subr.mxu0 %v493
  %v495 = vand.u32 %v228, 4294901760
  %v496 = vsub.f32 %v228, %v495
  %v497 = vand.u32 %v496, 4294901760
  %v498 = vsub.f32 %v496, %v497
  %v499 = vand.u32 %v498, 4294901760
  %500 = vmatpush1.msra.mxu0 %v499
  %v501 = vand.u32 %v227, 4294901760
  %v502 = vsub.f32 %v227, %v501
  %v503 = vand.u32 %v502, 4294901760
  %v504 = vsub.f32 %v502, %v503
  %v505 = vand.u32 %v504, 4294901760
  %506 = vmatprep.subr.mxu0 %v505
  %v507 = vand.u32 %v226, 4294901760
  %v508 = vsub.f32 %v226, %v507
  %v509 = vand.u32 %v508, 4294901760
  %v510 = vsub.f32 %v508, %v509
  %v511 = vand.u32 %v510, 4294901760
  %512 = vmatpush1.msra.mxu0 %v511
  %v513 = vand.u32 %v225, 4294901760
  %v514 = vsub.f32 %v225, %v513
  %v515 = vand.u32 %v514, 4294901760
  %v516 = vsub.f32 %v514, %v515
  %v517 = vand.u32 %v516, 4294901760
  %518 = vmatprep.subr.mxu0 %v517
  %v519 = vand.u32 %v224, 4294901760
  %v520 = vsub.f32 %v224, %v519
  %v521 = vand.u32 %v520, 4294901760
  %v522 = vsub.f32 %v520, %v521
  %v523 = vand.u32 %v522, 4294901760
  %524 = vmatpush1.msra.mxu0 %v523
  %v525 = vand.u32 %v223, 4294901760
  %v526 = vsub.f32 %v223, %v525
  %v527 = vand.u32 %v526, 4294901760
  %v528 = vsub.f32 %v526, %v527
  %v529 = vand.u32 %v528, 4294901760
  %530 = vmatprep.subr.mxu0 %v529
  %v531 = vand.u32 %v222, 4294901760
  %v532 = vsub.f32 %v222, %v531
  %v533 = vand.u32 %v532, 4294901760
  %v534 = vsub.f32 %v532, %v533
  %v535 = vand.u32 %v534, 4294901760
  %536 = vmatpush1.msra.mxu0 %v535
  %v537 = vand.u32 %v221, 4294901760
  %v538 = vsub.f32 %v221, %v537
  %v539 = vand.u32 %v538, 4294901760
  %v540 = vsub.f32 %v538, %v539
  %v541 = vand.u32 %v540, 4294901760
  %542 = vmatprep.subr.mxu0 %v541
  %v543 = vand.u32 %v220, 4294901760
  %v544 = vsub.f32 %v220, %v543
  %v545 = vand.u32 %v544, 4294901760
  %v546 = vsub.f32 %v544, %v545
  %v547 = vand.u32 %v546, 4294901760
  %548 = vmatpush1.msra.mxu0 %v547
  %549 = vmatprep.subr.mxu0 0.0
  %550 = vmatpush2.msra.mxu0 0.0
  %551 = vmatprep.subr.mxu0 0.0
  %552 = vmatpush2.msra.mxu0 0.0
  %553 = vmatprep.subr.mxu0 0.0
  %554 = vmatpush2.msra.mxu0 0.0
  %555 = vmatprep.subr.mxu0 0.0
  %556 = vmatpush2.msra.mxu0 0.0
  %557 = vmatprep.subr.mxu0 0.0
  %558 = vmatpush2.msra.mxu0 0.0
  %559 = vmatprep.subr.mxu0 0.0
  %560 = vmatpush2.msra.mxu0 0.0
  %561 = vmatprep.subr.mxu0 0.0
  %562 = vmatpush2.msra.mxu0 0.0
  %563 = vmatprep.subr.mxu0 0.0
  %564 = vmatpush2.msra.mxu0 0.0
  %565 = vmatprep.subr.mxu0 0.0
  %566 = vmatpush2.msra.mxu0 0.0
  %567 = vmatprep.subr.mxu0 0.0
  %568 = vmatpush2.msra.mxu0 0.0
  %569 = vmatprep.subr.mxu0 0.0
  %570 = vmatpush2.msra.mxu0 0.0
  %571 = vmatprep.subr.mxu0 0.0
  %572 = vmatpush2.msra.mxu0 0.0
  %573 = vmatprep.subr.mxu0 0.0
  %574 = vmatpush2.msra.mxu0 0.0
  %575 = vmatprep.subr.mxu0 0.0
  %576 = vmatpush2.msra.mxu0 0.0
  %577 = vmatprep.subr.mxu0 0.0
  %578 = vmatpush2.msra.mxu0 0.0
  %579 = vmatprep.subr.mxu0 0.0
  %580 = vmatpush2.msra.mxu0 0.0
  %581 = vmatprep.mubr.f32.mxu0 0.0
  %v582 = vand.u32 %v263, 4294901760
  %583 = vmatmul.mubr.f32.gmra.mxu0 %v582
  %v584 = vpop.f32.mrf.mxu0
  %v585 = vadd.f32 %v370, %v584
  %v586 = vpop.f32.mrf.mxu0
  %v587 = vadd.f32 %v372, %v586
  %588 = vmatprep.mubr.f32.mxu0 0.0
  %v589 = vand.u32 %v265, 4294901760
  %590 = vmatmul.mubr.f32.gmra.mxu0 %v589
  %v591 = vpop.f32.mrf.mxu0
  %v592 = vadd.f32 %v381, %v591
  %v593 = vpop.f32.mrf.mxu0
  %v594 = vadd.f32 %v383, %v593
  %595 = vmatprep.mubr.f32.mxu0 0.0
  %v596 = vand.u32 %v267, 4294901760
  %597 = vmatmul.mubr.f32.gmra.mxu0 %v596
  %v598 = vpop.f32.mrf.mxu0
  %v599 = vadd.f32 %v392, %v598
  %v600 = vpop.f32.mrf.mxu0
  %v601 = vadd.f32 %v394, %v600
  %602 = vmatprep.mubr.f32.mxu0 0.0
  %v603 = vand.u32 %v269, 4294901760
  %604 = vmatmul.mubr.f32.gmra.mxu0 %v603
  %v605 = vpop.f32.mrf.mxu0
  %v606 = vadd.f32 %v403, %v605
  %v607 = vpop.f32.mrf.mxu0
  %v608 = vadd.f32 %v405, %v607
  %609 = vdwg.mxu0
  %610 = vmatprep.subr.mxu0 0.0
  %611 = vmatpush1.msra.mxu0 0.0
  %612 = vmatprep.subr.mxu0 0.0
  %613 = vmatpush1.msra.mxu0 0.0
  %614 = vmatprep.subr.mxu0 0.0
  %615 = vmatpush1.msra.mxu0 0.0
  %616 = vmatprep.subr.mxu0 0.0
  %617 = vmatpush1.msra.mxu0 0.0
  %618 = vmatprep.subr.mxu0 0.0
  %619 = vmatpush1.msra.mxu0 0.0
  %v620 = vand.u32 %v274, 4294901760
  %v621 = vsub.f32 %v274, %v620
  %622 = vmatprep.subr.mxu0 %v621
  %v623 = vand.u32 %v272, 4294901760
  %v624 = vsub.f32 %v272, %v623
  %625 = vmatpush1.msra.mxu0 %v624
  %v626 = vand.u32 %v12, 4294901760
  %v627 = vsub.f32 %v12, %v626
  %628 = vmatprep.subr.mxu0 %v627
  %v629 = vand.u32 %v11, 4294901760
  %v630 = vsub.f32 %v11, %v629
  %631 = vmatpush1.msra.mxu0 %v630
  %v632 = vand.u32 %v237, 4294901760
  %v633 = vsub.f32 %v237, %v632
  %634 = vmatprep.subr.mxu0 %v633
  %v635 = vand.u32 %v236, 4294901760
  %v636 = vsub.f32 %v236, %v635
  %637 = vmatpush1.msra.mxu0 %v636
  %v638 = vand.u32 %v235, 4294901760
  %v639 = vsub.f32 %v235, %v638
  %640 = vmatprep.subr.mxu0 %v639
  %v641 = vand.u32 %v234, 4294901760
  %v642 = vsub.f32 %v234, %v641
  %643 = vmatpush1.msra.mxu0 %v642
  %v644 = vand.u32 %v233, 4294901760
  %v645 = vsub.f32 %v233, %v644
  %646 = vmatprep.subr.mxu0 %v645
  %v647 = vand.u32 %v232, 4294901760
  %v648 = vsub.f32 %v232, %v647
  %649 = vmatpush1.msra.mxu0 %v648
  %v650 = vand.u32 %v231, 4294901760
  %v651 = vsub.f32 %v231, %v650
  %652 = vmatprep.subr.mxu0 %v651
  %v653 = vand.u32 %v230, 4294901760
  %v654 = vsub.f32 %v230, %v653
  %655 = vmatpush1.msra.mxu0 %v654
  %v656 = vand.u32 %v229, 4294901760
  %v657 = vsub.f32 %v229, %v656
  %658 = vmatprep.subr.mxu0 %v657
  %v659 = vand.u32 %v228, 4294901760
  %v660 = vsub.f32 %v228, %v659
  %661 = vmatpush1.msra.mxu0 %v660
  %v662 = vand.u32 %v227, 4294901760
  %v663 = vsub.f32 %v227, %v662
  %664 = vmatprep.subr.mxu0 %v663
  %v665 = vand.u32 %v226, 4294901760
  %v666 = vsub.f32 %v226, %v665
  %667 = vmatpush1.msra.mxu0 %v666
  %v668 = vand.u32 %v225, 4294901760
  %v669 = vsub.f32 %v225, %v668
  %670 = vmatprep.subr.mxu0 %v669
  %v671 = vand.u32 %v224, 4294901760
  %v672 = vsub.f32 %v224, %v671
  %673 = vmatpush1.msra.mxu0 %v672
  %v674 = vand.u32 %v223, 4294901760
  %v675 = vsub.f32 %v223, %v674
  %676 = vmatprep.subr.mxu0 %v675
  %v677 = vand.u32 %v222, 4294901760
  %v678 = vsub.f32 %v222, %v677
  %679 = vmatpush1.msra.mxu0 %v678
  %v680 = vand.u32 %v221, 4294901760
  %v681 = vsub.f32 %v221, %v680
  %682 = vmatprep.subr.mxu0 %v681
  %v683 = vand.u32 %v220, 4294901760
  %v684 = vsub.f32 %v220, %v683
  %685 = vmatpush1.msra.mxu0 %v684
  %686 = vmatprep.subr.mxu0 0.0
  %687 = vmatpush2.msra.mxu0 0.0
  %688 = vmatprep.subr.mxu0 0.0
  %689 = vmatpush2.msra.mxu0 0.0
  %690 = vmatprep.subr.mxu0 0.0
  %691 = vmatpush2.msra.mxu0 0.0
  %692 = vmatprep.subr.mxu0 0.0
  %693 = vmatpush2.msra.mxu0 0.0
  %694 = vmatprep.subr.mxu0 0.0
  %695 = vmatpush2.msra.mxu0 0.0
  %696 = vmatprep.subr.mxu0 0.0
  %697 = vmatpush2.msra.mxu0 0.0
  %698 = vmatprep.subr.mxu0 0.0
  %699 = vmatpush2.msra.mxu0 0.0
  %700 = vmatprep.subr.mxu0 0.0
  %701 = vmatpush2.msra.mxu0 0.0
  %702 = vmatprep.subr.mxu0 0.0
  %703 = vmatpush2.msra.mxu0 0.0
  %704 = vmatprep.subr.mxu0 0.0
  %705 = vmatpush2.msra.mxu0 0.0
  %706 = vmatprep.subr.mxu0 0.0
  %707 = vmatpush2.msra.mxu0 0.0
  %708 = vmatprep.subr.mxu0 0.0
  %709 = vmatpush2.msra.mxu0 0.0
  %710 = vmatprep.subr.mxu0 0.0
  %711 = vmatpush2.msra.mxu0 0.0
  %712 = vmatprep.subr.mxu0 0.0
  %713 = vmatpush2.msra.mxu0 0.0
  %714 = vmatprep.subr.mxu0 0.0
  %715 = vmatpush2.msra.mxu0 0.0
  %716 = vmatprep.subr.mxu0 0.0
  %717 = vmatpush2.msra.mxu0 0.0
  %718 = vmatprep.mubr.f32.mxu0 0.0
  %v719 = vand.u32 %v263, 4294901760
  %v720 = vsub.f32 %v263, %v719
  %721 = vmatmul.mubr.f32.gmra.mxu0 %v720
  %v722 = vpop.f32.mrf.mxu0
  %v723 = vadd.f32 %v585, %v722
  %v724 = vpop.f32.mrf.mxu0
  %v725 = vadd.f32 %v587, %v724
  %726 = vmatprep.mubr.f32.mxu0 0.0
  %v727 = vand.u32 %v265, 4294901760
  %v728 = vsub.f32 %v265, %v727
  %729 = vmatmul.mubr.f32.gmra.mxu0 %v728
  %v730 = vpop.f32.mrf.mxu0
  %v731 = vadd.f32 %v592, %v730
  %v732 = vpop.f32.mrf.mxu0
  %v733 = vadd.f32 %v594, %v732
  %734 = vmatprep.mubr.f32.mxu0 0.0
  %v735 = vand.u32 %v267, 4294901760
  %v736 = vsub.f32 %v267, %v735
  %737 = vmatmul.mubr.f32.gmra.mxu0 %v736
  %v738 = vpop.f32.mrf.mxu0
  %v739 = vadd.f32 %v599, %v738
  %v740 = vpop.f32.mrf.mxu0
  %v741 = vadd.f32 %v601, %v740
  %742 = vmatprep.mubr.f32.mxu0 0.0
  %v743 = vand.u32 %v269, 4294901760
  %v744 = vsub.f32 %v269, %v743
  %745 = vmatmul.mubr.f32.gmra.mxu0 %v744
  %v746 = vpop.f32.mrf.mxu0
  %v747 = vadd.f32 %v606, %v746
  %v748 = vpop.f32.mrf.mxu0
  %v749 = vadd.f32 %v608, %v748
  %750 = vdwg.mxu0
  %751 = vmatprep.subr.mxu0 0.0
  %752 = vmatpush1.msra.mxu0 0.0
  %753 = vmatprep.subr.mxu0 0.0
  %754 = vmatpush1.msra.mxu0 0.0
  %755 = vmatprep.subr.mxu0 0.0
  %756 = vmatpush1.msra.mxu0 0.0
  %757 = vmatprep.subr.mxu0 0.0
  %758 = vmatpush1.msra.mxu0 0.0
  %759 = vmatprep.subr.mxu0 0.0
  %760 = vmatpush1.msra.mxu0 0.0
  %v761 = vand.u32 %v274, 4294901760
  %762 = vmatprep.subr.mxu0 %v761
  %v763 = vand.u32 %v272, 4294901760
  %764 = vmatpush1.msra.mxu0 %v763
  %v765 = vand.u32 %v12, 4294901760
  %766 = vmatprep.subr.mxu0 %v765
  %v767 = vand.u32 %v11, 4294901760
  %768 = vmatpush1.msra.mxu0 %v767
  %v769 = vand.u32 %v237, 4294901760
  %770 = vmatprep.subr.mxu0 %v769
  %v771 = vand.u32 %v236, 4294901760
  %772 = vmatpush1.msra.mxu0 %v771
  %v773 = vand.u32 %v235, 4294901760
  %774 = vmatprep.subr.mxu0 %v773
  %v775 = vand.u32 %v234, 4294901760
  %776 = vmatpush1.msra.mxu0 %v775
  %v777 = vand.u32 %v233, 4294901760
  %778 = vmatprep.subr.mxu0 %v777
  %v779 = vand.u32 %v232, 4294901760
  %780 = vmatpush1.msra.mxu0 %v779
  %v781 = vand.u32 %v231, 4294901760
  %782 = vmatprep.subr.mxu0 %v781
  %v783 = vand.u32 %v230, 4294901760
  %784 = vmatpush1.msra.mxu0 %v783
  %v785 = vand.u32 %v229, 4294901760
  %786 = vmatprep.subr.mxu0 %v785
  %v787 = vand.u32 %v228, 4294901760
  %788 = vmatpush1.msra.mxu0 %v787
  %v789 = vand.u32 %v227, 4294901760
  %790 = vmatprep.subr.mxu0 %v789
  %v791 = vand.u32 %v226, 4294901760
  %792 = vmatpush1.msra.mxu0 %v791
  %v793 = vand.u32 %v225, 4294901760
  %794 = vmatprep.subr.mxu0 %v793
  %v795 = vand.u32 %v224, 4294901760
  %796 = vmatpush1.msra.mxu0 %v795
  %v797 = vand.u32 %v223, 4294901760
  %798 = vmatprep.subr.mxu0 %v797
  %v799 = vand.u32 %v222, 4294901760
  %800 = vmatpush1.msra.mxu0 %v799
  %v801 = vand.u32 %v221, 4294901760
  %802 = vmatprep.subr.mxu0 %v801
  %v803 = vand.u32 %v220, 4294901760
  %804 = vmatpush1.msra.mxu0 %v803
  %805 = vmatprep.subr.mxu0 0.0
  %806 = vmatpush2.msra.mxu0 0.0
  %807 = vmatprep.subr.mxu0 0.0
  %808 = vmatpush2.msra.mxu0 0.0
  %809 = vmatprep.subr.mxu0 0.0
  %810 = vmatpush2.msra.mxu0 0.0
  %811 = vmatprep.subr.mxu0 0.0
  %812 = vmatpush2.msra.mxu0 0.0
  %813 = vmatprep.subr.mxu0 0.0
  %814 = vmatpush2.msra.mxu0 0.0
  %815 = vmatprep.subr.mxu0 0.0
  %816 = vmatpush2.msra.mxu0 0.0
  %817 = vmatprep.subr.mxu0 0.0
  %818 = vmatpush2.msra.mxu0 0.0
  %819 = vmatprep.subr.mxu0 0.0
  %820 = vmatpush2.msra.mxu0 0.0
  %821 = vmatprep.subr.mxu0 0.0
  %822 = vmatpush2.msra.mxu0 0.0
  %823 = vmatprep.subr.mxu0 0.0
  %824 = vmatpush2.msra.mxu0 0.0
  %825 = vmatprep.subr.mxu0 0.0
  %826 = vmatpush2.msra.mxu0 0.0
  %827 = vmatprep.subr.mxu0 0.0
  %828 = vmatpush2.msra.mxu0 0.0
  %829 = vmatprep.subr.mxu0 0.0
  %830 = vmatpush2.msra.mxu0 0.0
  %831 = vmatprep.subr.mxu0 0.0
  %832 = vmatpush2.msra.mxu0 0.0
  %833 = vmatprep.subr.mxu0 0.0
  %834 = vmatpush2.msra.mxu0 0.0
  %835 = vmatprep.subr.mxu0 0.0
  %836 = vmatpush2.msra.mxu0 0.0
  %837 = vmatprep.mubr.f32.mxu0 0.0
  %v838 = vand.u32 %v263, 4294901760
  %v839 = vsub.f32 %v263, %v838
  %v840 = vand.u32 %v839, 4294901760
  %841 = vmatmul.mubr.f32.gmra.mxu0 %v840
  %v842 = vpop.f32.mrf.mxu0
  %v843 = vadd.f32 %v723, %v842
  %v844 = vpop.f32.mrf.mxu0
  %v845 = vadd.f32 %v725, %v844
  %846 = vmatprep.mubr.f32.mxu0 0.0
  %v847 = vand.u32 %v265, 4294901760
  %v848 = vsub.f32 %v265, %v847
  %v849 = vand.u32 %v848, 4294901760
  %850 = vmatmul.mubr.f32.gmra.mxu0 %v849
  %v851 = vpop.f32.mrf.mxu0
  %v852 = vadd.f32 %v731, %v851
  %v853 = vpop.f32.mrf.mxu0
  %v854 = vadd.f32 %v733, %v853
  %855 = vmatprep.mubr.f32.mxu0 0.0
  %v856 = vand.u32 %v267, 4294901760
  %v857 = vsub.f32 %v267, %v856
  %v858 = vand.u32 %v857, 4294901760
  %859 = vmatmul.mubr.f32.gmra.mxu0 %v858
  %v860 = vpop.f32.mrf.mxu0
  %v861 = vadd.f32 %v739, %v860
  %v862 = vpop.f32.mrf.mxu0
  %v863 = vadd.f32 %v741, %v862
  %864 = vmatprep.mubr.f32.mxu0 0.0
  %v865 = vand.u32 %v269, 4294901760
  %v866 = vsub.f32 %v269, %v865
  %v867 = vand.u32 %v866, 4294901760
  %868 = vmatmul.mubr.f32.gmra.mxu0 %v867
  %v869 = vpop.f32.mrf.mxu0
  %v870 = vadd.f32 %v747, %v869
  %v871 = vpop.f32.mrf.mxu0
  %v872 = vadd.f32 %v749, %v871
  %873 = vdwg.mxu0
  %874 = vmatprep.subr.mxu0 0.0
  %875 = vmatpush1.msra.mxu0 0.0
  %876 = vmatprep.subr.mxu0 0.0
  %877 = vmatpush1.msra.mxu0 0.0
  %878 = vmatprep.subr.mxu0 0.0
  %879 = vmatpush1.msra.mxu0 0.0
  %880 = vmatprep.subr.mxu0 0.0
  %881 = vmatpush1.msra.mxu0 0.0
  %882 = vmatprep.subr.mxu0 0.0
  %883 = vmatpush1.msra.mxu0 0.0
  %v884 = vand.u32 %v274, 4294901760
  %v885 = vsub.f32 %v274, %v884
  %v886 = vand.u32 %v885, 4294901760
  %887 = vmatprep.subr.mxu0 %v886
  %v888 = vand.u32 %v272, 4294901760
  %v889 = vsub.f32 %v272, %v888
  %v890 = vand.u32 %v889, 4294901760
  %891 = vmatpush1.msra.mxu0 %v890
  %v892 = vand.u32 %v12, 4294901760
  %v893 = vsub.f32 %v12, %v892
  %v894 = vand.u32 %v893, 4294901760
  %895 = vmatprep.subr.mxu0 %v894
  %v896 = vand.u32 %v11, 4294901760
  %v897 = vsub.f32 %v11, %v896
  %v898 = vand.u32 %v897, 4294901760
  %899 = vmatpush1.msra.mxu0 %v898
  %v900 = vand.u32 %v237, 4294901760
  %v901 = vsub.f32 %v237, %v900
  %v902 = vand.u32 %v901, 4294901760
  %903 = vmatprep.subr.mxu0 %v902
  %v904 = vand.u32 %v236, 4294901760
  %v905 = vsub.f32 %v236, %v904
  %v906 = vand.u32 %v905, 4294901760
  %907 = vmatpush1.msra.mxu0 %v906
  %v908 = vand.u32 %v235, 4294901760
  %v909 = vsub.f32 %v235, %v908
  %v910 = vand.u32 %v909, 4294901760
  %911 = vmatprep.subr.mxu0 %v910
  %v912 = vand.u32 %v234, 4294901760
  %v913 = vsub.f32 %v234, %v912
  %v914 = vand.u32 %v913, 4294901760
  %915 = vmatpush1.msra.mxu0 %v914
  %v916 = vand.u32 %v233, 4294901760
  %v917 = vsub.f32 %v233, %v916
  %v918 = vand.u32 %v917, 4294901760
  %919 = vmatprep.subr.mxu0 %v918
  %v920 = vand.u32 %v232, 4294901760
  %v921 = vsub.f32 %v232, %v920
  %v922 = vand.u32 %v921, 4294901760
  %923 = vmatpush1.msra.mxu0 %v922
  %v924 = vand.u32 %v231, 4294901760
  %v925 = vsub.f32 %v231, %v924
  %v926 = vand.u32 %v925, 4294901760
  %927 = vmatprep.subr.mxu0 %v926
  %v928 = vand.u32 %v230, 4294901760
  %v929 = vsub.f32 %v230, %v928
  %v930 = vand.u32 %v929, 4294901760
  %931 = vmatpush1.msra.mxu0 %v930
  %v932 = vand.u32 %v229, 4294901760
  %v933 = vsub.f32 %v229, %v932
  %v934 = vand.u32 %v933, 4294901760
  %935 = vmatprep.subr.mxu0 %v934
  %v936 = vand.u32 %v228, 4294901760
  %v937 = vsub.f32 %v228, %v936
  %v938 = vand.u32 %v937, 4294901760
  %939 = vmatpush1.msra.mxu0 %v938
  %v940 = vand.u32 %v227, 4294901760
  %v941 = vsub.f32 %v227, %v940
  %v942 = vand.u32 %v941, 4294901760
  %943 = vmatprep.subr.mxu0 %v942
  %v944 = vand.u32 %v226, 4294901760
  %v945 = vsub.f32 %v226, %v944
  %v946 = vand.u32 %v945, 4294901760
  %947 = vmatpush1.msra.mxu0 %v946
  %v948 = vand.u32 %v225, 4294901760
  %v949 = vsub.f32 %v225, %v948
  %v950 = vand.u32 %v949, 4294901760
  %951 = vmatprep.subr.mxu0 %v950
  %v952 = vand.u32 %v224, 4294901760
  %v953 = vsub.f32 %v224, %v952
  %v954 = vand.u32 %v953, 4294901760
  %955 = vmatpush1.msra.mxu0 %v954
  %v956 = vand.u32 %v223, 4294901760
  %v957 = vsub.f32 %v223, %v956
  %v958 = vand.u32 %v957, 4294901760
  %959 = vmatprep.subr.mxu0 %v958
  %v960 = vand.u32 %v222, 4294901760
  %v961 = vsub.f32 %v222, %v960
  %v962 = vand.u32 %v961, 4294901760
  %963 = vmatpush1.msra.mxu0 %v962
  %v964 = vand.u32 %v221, 4294901760
  %v965 = vsub.f32 %v221, %v964
  %v966 = vand.u32 %v965, 4294901760
  %967 = vmatprep.subr.mxu0 %v966
  %v968 = vand.u32 %v220, 4294901760
  %v969 = vsub.f32 %v220, %v968
  %v970 = vand.u32 %v969, 4294901760
  %971 = vmatpush1.msra.mxu0 %v970
  %972 = vmatprep.subr.mxu0 0.0
  %973 = vmatpush2.msra.mxu0 0.0
  %974 = vmatprep.subr.mxu0 0.0
  %975 = vmatpush2.msra.mxu0 0.0
  %976 = vmatprep.subr.mxu0 0.0
  %977 = vmatpush2.msra.mxu0 0.0
  %978 = vmatprep.subr.mxu0 0.0
  %979 = vmatpush2.msra.mxu0 0.0
  %980 = vmatprep.subr.mxu0 0.0
  %981 = vmatpush2.msra.mxu0 0.0
  %982 = vmatprep.subr.mxu0 0.0
  %983 = vmatpush2.msra.mxu0 0.0
  %984 = vmatprep.subr.mxu0 0.0
  %985 = vmatpush2.msra.mxu0 0.0
  %986 = vmatprep.subr.mxu0 0.0
  %987 = vmatpush2.msra.mxu0 0.0
  %988 = vmatprep.subr.mxu0 0.0
  %989 = vmatpush2.msra.mxu0 0.0
  %990 = vmatprep.subr.mxu0 0.0
  %991 = vmatpush2.msra.mxu0 0.0
  %992 = vmatprep.subr.mxu0 0.0
  %993 = vmatpush2.msra.mxu0 0.0
  %994 = vmatprep.subr.mxu0 0.0
  %995 = vmatpush2.msra.mxu0 0.0
  %996 = vmatprep.subr.mxu0 0.0
  %997 = vmatpush2.msra.mxu0 0.0
  %998 = vmatprep.subr.mxu0 0.0
  %999 = vmatpush2.msra.mxu0 0.0
  %1000 = vmatprep.subr.mxu0 0.0
  %1001 = vmatpush2.msra.mxu0 0.0
  %1002 = vmatprep.subr.mxu0 0.0
  %1003 = vmatpush2.msra.mxu0 0.0
  %1004 = vmatprep.mubr.f32.mxu0 0.0
  %v1005 = vand.u32 %v263, 4294901760
  %1006 = vmatmul.mubr.f32.gmra.mxu0 %v1005
  %v1007 = vpop.f32.mrf.mxu0
  %v1008 = vadd.f32 %v843, %v1007
  %v1009 = vpop.f32.mrf.mxu0
  %v1010 = vadd.f32 %v845, %v1009
  %1011 = vmatprep.mubr.f32.mxu0 0.0
  %v1012 = vand.u32 %v265, 4294901760
  %1013 = vmatmul.mubr.f32.gmra.mxu0 %v1012
  %v1014 = vpop.f32.mrf.mxu0
  %v1015 = vadd.f32 %v852, %v1014
  %v1016 = vpop.f32.mrf.mxu0
  %v1017 = vadd.f32 %v854, %v1016
  %1018 = vmatprep.mubr.f32.mxu0 0.0
  %v1019 = vand.u32 %v267, 4294901760
  %1020 = vmatmul.mubr.f32.gmra.mxu0 %v1019
  %v1021 = vpop.f32.mrf.mxu0
  %v1022 = vadd.f32 %v861, %v1021
  %v1023 = vpop.f32.mrf.mxu0
  %v1024 = vadd.f32 %v863, %v1023
  %1025 = vmatprep.mubr.f32.mxu0 0.0
  %v1026 = vand.u32 %v269, 4294901760
  %1027 = vmatmul.mubr.f32.gmra.mxu0 %v1026
  %v1028 = vpop.f32.mrf.mxu0
  %v1029 = vadd.f32 %v870, %v1028
  %v1030 = vpop.f32.mrf.mxu0
  %v1031 = vadd.f32 %v872, %v1030
  %1032 = vdwg.mxu0
  %1033 = vmatprep.subr.mxu0 0.0
  %1034 = vmatpush1.msra.mxu0 0.0
  %1035 = vmatprep.subr.mxu0 0.0
  %1036 = vmatpush1.msra.mxu0 0.0
  %1037 = vmatprep.subr.mxu0 0.0
  %1038 = vmatpush1.msra.mxu0 0.0
  %1039 = vmatprep.subr.mxu0 0.0
  %1040 = vmatpush1.msra.mxu0 0.0
  %1041 = vmatprep.subr.mxu0 0.0
  %1042 = vmatpush1.msra.mxu0 0.0
  %v1043 = vand.u32 %v274, 4294901760
  %1044 = vmatprep.subr.mxu0 %v1043
  %v1045 = vand.u32 %v272, 4294901760
  %1046 = vmatpush1.msra.mxu0 %v1045
  %v1047 = vand.u32 %v12, 4294901760
  %1048 = vmatprep.subr.mxu0 %v1047
  %v1049 = vand.u32 %v11, 4294901760
  %1050 = vmatpush1.msra.mxu0 %v1049
  %v1051 = vand.u32 %v237, 4294901760
  %1052 = vmatprep.subr.mxu0 %v1051
  %v1053 = vand.u32 %v236, 4294901760
  %1054 = vmatpush1.msra.mxu0 %v1053
  %v1055 = vand.u32 %v235, 4294901760
  %1056 = vmatprep.subr.mxu0 %v1055
  %v1057 = vand.u32 %v234, 4294901760
  %1058 = vmatpush1.msra.mxu0 %v1057
  %v1059 = vand.u32 %v233, 4294901760
  %1060 = vmatprep.subr.mxu0 %v1059
  %v1061 = vand.u32 %v232, 4294901760
  %1062 = vmatpush1.msra.mxu0 %v1061
  %v1063 = vand.u32 %v231, 4294901760
  %1064 = vmatprep.subr.mxu0 %v1063
  %v1065 = vand.u32 %v230, 4294901760
  %1066 = vmatpush1.msra.mxu0 %v1065
  %v1067 = vand.u32 %v229, 4294901760
  %1068 = vmatprep.subr.mxu0 %v1067
  %v1069 = vand.u32 %v228, 4294901760
  %1070 = vmatpush1.msra.mxu0 %v1069
  %v1071 = vand.u32 %v227, 4294901760
  %1072 = vmatprep.subr.mxu0 %v1071
  %v1073 = vand.u32 %v226, 4294901760
  %1074 = vmatpush1.msra.mxu0 %v1073
  %v1075 = vand.u32 %v225, 4294901760
  %1076 = vmatprep.subr.mxu0 %v1075
  %v1077 = vand.u32 %v224, 4294901760
  %1078 = vmatpush1.msra.mxu0 %v1077
  %v1079 = vand.u32 %v223, 4294901760
  %1080 = vmatprep.subr.mxu0 %v1079
  %v1081 = vand.u32 %v222, 4294901760
  %1082 = vmatpush1.msra.mxu0 %v1081
  %v1083 = vand.u32 %v221, 4294901760
  %1084 = vmatprep.subr.mxu0 %v1083
  %v1085 = vand.u32 %v220, 4294901760
  %1086 = vmatpush1.msra.mxu0 %v1085
  %1087 = vmatprep.subr.mxu0 0.0
  %1088 = vmatpush2.msra.mxu0 0.0
  %1089 = vmatprep.subr.mxu0 0.0
  %1090 = vmatpush2.msra.mxu0 0.0
  %1091 = vmatprep.subr.mxu0 0.0
  %1092 = vmatpush2.msra.mxu0 0.0
  %1093 = vmatprep.subr.mxu0 0.0
  %1094 = vmatpush2.msra.mxu0 0.0
  %1095 = vmatprep.subr.mxu0 0.0
  %1096 = vmatpush2.msra.mxu0 0.0
  %1097 = vmatprep.subr.mxu0 0.0
  %1098 = vmatpush2.msra.mxu0 0.0
  %1099 = vmatprep.subr.mxu0 0.0
  %1100 = vmatpush2.msra.mxu0 0.0
  %1101 = vmatprep.subr.mxu0 0.0
  %1102 = vmatpush2.msra.mxu0 0.0
  %1103 = vmatprep.subr.mxu0 0.0
  %1104 = vmatpush2.msra.mxu0 0.0
  %1105 = vmatprep.subr.mxu0 0.0
  %1106 = vmatpush2.msra.mxu0 0.0
  %1107 = vmatprep.subr.mxu0 0.0
  %1108 = vmatpush2.msra.mxu0 0.0
  %1109 = vmatprep.subr.mxu0 0.0
  %1110 = vmatpush2.msra.mxu0 0.0
  %1111 = vmatprep.subr.mxu0 0.0
  %1112 = vmatpush2.msra.mxu0 0.0
  %1113 = vmatprep.subr.mxu0 0.0
  %1114 = vmatpush2.msra.mxu0 0.0
  %1115 = vmatprep.subr.mxu0 0.0
  %1116 = vmatpush2.msra.mxu0 0.0
  %1117 = vmatprep.subr.mxu0 0.0
  %1118 = vmatpush2.msra.mxu0 0.0
  %1119 = vmatprep.mubr.f32.mxu0 0.0
  %v1120 = vand.u32 %v263, 4294901760
  %1121 = vmatmul.mubr.f32.gmra.mxu0 %v1120
  %v1122 = vpop.f32.mrf.mxu0
  %v1123 = vadd.f32 %v1008, %v1122
  %v1124 = vpop.f32.mrf.mxu0
  %v1125 = vadd.f32 %v1010, %v1124
  %1126 = vmatprep.mubr.f32.mxu0 0.0
  %v1127 = vand.u32 %v265, 4294901760
  %1128 = vmatmul.mubr.f32.gmra.mxu0 %v1127
  %v1129 = vpop.f32.mrf.mxu0
  %v1130 = vadd.f32 %v1015, %v1129
  %v1131 = vpop.f32.mrf.mxu0
  %v1132 = vadd.f32 %v1017, %v1131
  %1133 = vmatprep.mubr.f32.mxu0 0.0
  %v1134 = vand.u32 %v267, 4294901760
  %1135 = vmatmul.mubr.f32.gmra.mxu0 %v1134
  %v1136 = vpop.f32.mrf.mxu0
  %v1137 = vadd.f32 %v1022, %v1136
  %v1138 = vpop.f32.mrf.mxu0
  %v1139 = vadd.f32 %v1024, %v1138
  %1140 = vmatprep.mubr.f32.mxu0 0.0
  %v1141 = vand.u32 %v269, 4294901760
  %1142 = vmatmul.mubr.f32.gmra.mxu0 %v1141
  %v1143 = vpop.f32.mrf.mxu0
  %v1144 = vadd.f32 %v1029, %v1143
  %v1145 = vpop.f32.mrf.mxu0
  %v1146 = vadd.f32 %v1031, %v1145
  %1147 = vdwg.mxu0
  %v1148 = vmax.f32 %v1123, 0.0
  %v1149 = vmax.f32 %v1125, 0.0
  %v1150 = vmax.f32 %v1130, 0.0
  %v1151 = vmax.f32 %v1132, 0.0
  %v1152 = vmax.f32 %v1137, 0.0
  %v1153 = vmax.f32 %v1139, 0.0
  %v1154 = vmax.f32 %v1144, 0.0
  %v1155 = vmax.f32 %v1146, 0.0
  %v1156 = vadd.f32 %v1148, %v1152
  %v1157 = vadd.f32 %v1149, %v1153
  %v1158 = vadd.f32 %v1150, %v1154
  %v1159 = vadd.f32 %v1151, %v1155
  %1160 = vst [vmem:[%s2] sm:$0xff] %v1156
  %1161 = vst [vmem:[%s2 + $0x8] sm:$0xff] %v1157
  %1162 = vst [vmem:[%s2 + $0x10] sm:$0xff] %v1158
  %1163 = vst [vmem:[%s2 + $0x18] sm:$0xff] %v1159
  // Predicated region
  $region10: #{model_forward.1} parent=0 // pred_check
    _
  $region11: #{model_forward.1} parent=0 // pred_check_branch
    %1165 = sbr.rel (0) target = $region13
  $region12: #{model_forward.1} parent=0 // pred_region
    _
  $region13: #{model_forward.1} parent=0 // pred_fallthru
    _
  // Predicated region
  $region14: #{model_forward.1} parent=0 // pred_check
    _
  $region15: #{model_forward.1} parent=0 // pred_check_branch
    %1167 = sbr.rel (0) target = $region17
  $region16: #{model_forward.1} parent=0 // pred_region
    _
  $region17: #{model_forward.1} parent=0 // pred_fallthru
    _

</llo_original>
